<compile_context>
chip_gen: v7x
topology: tpu7x:2x2x1
jax: 0.10.0
libtpu: 0.0.40
codegen_flags: <defaults>
</compile_context>

<pallas_src>
import math
import functools

import jax
import jax.numpy as jnp
from jax.experimental import pallas as pl
from jax.experimental.pallas import tpu as pltpu


def _head_kernel(x_ref, w_ref, b_ref, mu_ref, sig_ref, *, out_size, min_var):
    """One batch tile: fused MXU projection in transposed (2*out, tile_b)
    layout; mu = first out_size rows, sigma = sqrt(softplus(rest) + min_var)."""
    xv = x_ref[...]                                    # (tile_b, in)
    if xv.dtype != w_ref.dtype:                        # trace-time branch only
        xv = xv.astype(w_ref.dtype)

    # (2*out, tile_b): contract w_fused dim 0 (in) with x dim 1 (in). The big
    # batch dim lands on the 128-lane axis -> lane-dense, unmasked stores.
    y = jax.lax.dot_general(
        w_ref[...], xv,
        dimension_numbers=(((0,), (1,)), ((), ())),
        preferred_element_type=jnp.float32,
    )
    y = y + b_ref[...]                                 # (2*out, 1) lane-broadcast

    mu_ref[...] = y[:out_size, :].astype(mu_ref.dtype)

    # Numerically-stable softplus + sqrt, on the sigma rows only
    # (half the exp/log1p/sqrt traffic through the single EUP slot).
    z = y[out_size:, :]
    sp = jnp.maximum(z, 0.0) + jnp.log1p(jnp.exp(-jnp.abs(z)))
    sig_ref[...] = jnp.sqrt(sp + min_var).astype(sig_ref.dtype)
    # TODO(synk): `lim` branch (0.5*(tanh(mu)+1)/(high-low)+low) not implemented;
    #             the module is constructed with lim=None on this path.


def prepare_params(w, b, *, param_dtype=jnp.float32):
    """Init-time parameter plumbing (hoisted out of the forward path).

    w: torch-layout (2*out_size, input_size) linear weight
    b: (2*out_size,) bias
    Returns w_fused (input_size, 2*out_size) in `param_dtype` and the f32 bias
    as a (2*out_size, 1) column (lane-broadcast in the transposed layout).
    Default is f32 (kernel is HBM-bound on x, f32 matmul ~free); pass
    jnp.bfloat16 together with bf16 activations to halve HBM-read traffic.
    """
    w_fused = jnp.asarray(w, dtype=jnp.float32).T.astype(param_dtype)
    b_fused = jnp.asarray(b, dtype=jnp.float32).reshape(-1, 1)
    return w_fused, b_fused


def _vmem_capacity_bytes():
    try:
        cap = int(pltpu.get_tpu_info().vmem_capacity_bytes)
        if cap > 0:
            return cap
    except Exception:
        pass
    return 64 << 20          # conservative floor: v7x physical per-TC VMEM


def _pick_batch_tile(batch, per_row_bytes, fixed_bytes, budget):
    """Largest 128-multiple batch tile whose total pipelined footprint
    (resident W/b + 2x double-buffered x block + 2x double-buffered outputs)
    fits `budget`. Prefers exact divisors of `batch` (no ragged edge); the
    wrapper uses pl.cdiv so a ragged last block is also legal. Keeps >= 2 grid
    steps when batch >= 256 so v7x's two TensorCores both get work."""
    def fits(t):
        return fixed_bytes + 2 * t * per_row_bytes <= budget

    max_t = batch if batch < 256 else batch // 2
    cands = [t for t in (4096, 2048, 1024, 512, 256, 128) if t <= max_t]
    for t in cands:                       # exact divisors first
        if batch % t == 0 and fits(t):
            return t
    for t in cands:                       # ragged last block via cdiv grid
        if fits(t):
            return t
    # tiny batch: one full-array block (legal for any size); otherwise fall
    # back to the minimum lane-dense tile.
    return batch if batch < 128 else 128


def diag_gaussian_head(x, w_fused, b_fused, out_size, min_var=0.0,
                       batch_major=True):
    """x: (B, in); w_fused: (in, 2*out) [pre-transposed]; b_fused: (2*out, 1).

    Returns (mu, sigma) as (B, out) arrays if batch_major, else in the
    kernel-native feature-major (out, B) layout (zero extra HBM passes)."""
    B, in_size = x.shape
    two_out = 2 * out_size
    assert w_fused.shape == (in_size, two_out)
    assert b_fused.shape == (two_out, 1)

    cap = _vmem_capacity_bytes()
    fixed = 2 * (w_fused.size * w_fused.dtype.itemsize
                 + b_fused.size * b_fused.dtype.itemsize)
    # per-batch-element bytes: one x row + one f32 column of each output
    per_row = in_size * x.dtype.itemsize + two_out * 4
    tile_b = _pick_batch_tile(B, per_row, fixed, budget=int(cap * 0.45))
    num_steps = pl.cdiv(B, tile_b)

    x_spec_kwargs = {}
    if num_steps >= 3 and tile_b <= 256:
        # short per-tile compute: deepen the x pipeline to keep DMAs queued
        x_spec_kwargs["pipeline_mode"] = pl.Buffered(3)

    kernel = functools.partial(_head_kernel, out_size=out_size,
                               min_var=float(min_var))

    mu_t, sig_t = pl.pallas_call(
        kernel,
        out_shape=(jax.ShapeDtypeStruct((out_size, B), jnp.float32),
                   jax.ShapeDtypeStruct((out_size, B), jnp.float32)),
        grid=(num_steps,),
        in_specs=[
            pl.BlockSpec((tile_b, in_size), lambda i: (i, 0), **x_spec_kwargs),
            pl.BlockSpec((in_size, two_out), lambda i: (0, 0)),   # W: resident
            pl.BlockSpec((two_out, 1), lambda i: (0, 0)),         # b: resident
        ],
        out_specs=(
            pl.BlockSpec((out_size, tile_b), lambda i: (0, i)),   # mu  (lane-dense)
            pl.BlockSpec((out_size, tile_b), lambda i: (0, i)),   # sig (lane-dense)
        ),
        compiler_params=pltpu.CompilerParams(
            dimension_semantics=("parallel",),
            vmem_limit_bytes=int(cap * 0.7),
        ),
    )(x, w_fused, b_fused)

    if batch_major:
        # tiny (out, B) -> (B, out) transposes; output bytes are negligible
        # next to the x read. Consumers that accept feature-major should pass
        # batch_major=False and skip this pass entirely.
        return mu_t.T, sig_t.T
    return mu_t, sig_t


diag_gaussian_head_jit = jax.jit(
    diag_gaussian_head,
    static_argnames=("out_size", "min_var", "batch_major"))


def _ref_forward(x, w, b, out_size, min_var, cast_dtype=None):
    """Pure-JAX reference of the torch module (optionally mirroring a bf16
    operand cast for a tight numerical check of the bf16 path)."""
    if cast_dtype is not None:
        xr = x.astype(cast_dtype).astype(jnp.float32)
        wr = w.astype(cast_dtype).astype(jnp.float32)
    else:
        xr, wr = x, w
    y = jnp.dot(xr, wr.T, precision=jax.lax.Precision.HIGHEST,
                preferred_element_type=jnp.float32) + b
    mu = y[:, :out_size]
    z = y[:, out_size:]
    sp = jnp.where(z > 20.0, z, jnp.log1p(jnp.exp(jnp.minimum(z, 20.0))))
    sig = jnp.sqrt(sp + min_var)
    return mu, sig


if __name__ == "__main__":
    key = jax.random.PRNGKey(0)
    batch, input_size, out_size = 2, 32, 8
    min_var = 0.0

    k_x, k_w, k_b = jax.random.split(key, 3)
    x = jax.random.normal(k_x, (batch, input_size), dtype=jnp.float32)

    # deterministic nn.Linear-style init: U(-1/sqrt(in), 1/sqrt(in))
    bound = 1.0 / math.sqrt(input_size)
    w = jax.random.uniform(k_w, (out_size * 2, input_size),
                           minval=-bound, maxval=bound, dtype=jnp.float32)
    b = jax.random.uniform(k_b, (out_size * 2,),
                           minval=-bound, maxval=bound, dtype=jnp.float32)

    # ---- f32 path: matches torch nn.Linear precision (default) ----
    w_f32, b_f32 = prepare_params(w, b, param_dtype=jnp.float32)
    mu, sig = diag_gaussian_head_jit(x, w_f32, b_f32,
                                     out_size=out_size, min_var=min_var)
    mu = jax.block_until_ready(mu)
    sig = jax.block_until_ready(sig)

    mu_r, sig_r = _ref_forward(x, w, b, out_size, min_var)
    assert mu.shape == (batch, out_size) and sig.shape == (batch, out_size)
    assert jnp.allclose(mu, mu_r, atol=1e-4, rtol=1e-4), "mu mismatch (f32)"
    assert jnp.allclose(sig, sig_r, atol=1e-4, rtol=1e-4), "sigma mismatch (f32)"

    # ---- bf16 path: opt-in bandwidth saving (x + W in bf16) ----
    w_bf, b_bf = prepare_params(w, b, param_dtype=jnp.bfloat16)
    x_bf = x.astype(jnp.bfloat16)
    mu_b, sig_b = diag_gaussian_head_jit(x_bf, w_bf, b_bf,
                                         out_size=out_size, min_var=min_var)
    mu_b = jax.block_until_ready(mu_b)
    sig_b = jax.block_until_ready(sig_b)

    mu_br, sig_br = _ref_forward(x, w, b, out_size, min_var,
                                 cast_dtype=jnp.bfloat16)
    assert jnp.allclose(mu_b, mu_br, atol=2e-3, rtol=2e-3), "mu mismatch (bf16)"
    assert jnp.allclose(sig_b, sig_br, atol=2e-3, rtol=2e-3), "sigma mismatch (bf16)"

    print("KERNEL_OK")
</pallas_src>

<mosaic_0001>
module attributes {stable_mosaic.version = 11 : i64} {
  func.func @_head_kernel(%arg0: i32, %arg1: memref<2x32xf32, #tpu.memory_space<vmem>>, %arg2: memref<32x16xf32, #tpu.memory_space<vmem>>, %arg3: memref<16x1xf32, #tpu.memory_space<vmem>>, %arg4: memref<8x2xf32, #tpu.memory_space<vmem>>, %arg5: memref<8x2xf32, #tpu.memory_space<vmem>>) attributes {dimension_semantics = [#tpu.dimension_semantics<parallel>], iteration_bounds = array<i64: 1>, scalar_prefetch = 0 : i64, scratch_operands = 0 : i64, tpu.core_type = #tpu.core_type<tc>, window_params = [{transform_indices = @transform_0, window_bounds = array<i64: 2, 32>}, {pipeline_mode = #tpu.pipeline_mode<synchronous>, transform_indices = @transform_1, window_bounds = array<i64: 32, 16>}, {pipeline_mode = #tpu.pipeline_mode<synchronous>, transform_indices = @transform_2, window_bounds = array<i64: 16, 1>}, {transform_indices = @transform_3, window_bounds = array<i64: 8, 2>}, {transform_indices = @transform_4, window_bounds = array<i64: 8, 2>}]} {
    %c0 = arith.constant 0 : index
    %c0_0 = arith.constant 0 : index
    %0 = vector.load %arg1[%c0, %c0_0] : memref<2x32xf32, #tpu.memory_space<vmem>>, vector<2x32xf32>
    %c0_1 = arith.constant 0 : index
    %c0_2 = arith.constant 0 : index
    %1 = vector.load %arg2[%c0_1, %c0_2] : memref<32x16xf32, #tpu.memory_space<vmem>>, vector<32x16xf32>
    %cst = arith.constant dense<0.000000e+00> : vector<16x2xf32>
    %2 = tpu.matmul %1, %0, %cst {dimension_numbers = #tpu.dot_dimension_numbers<[0], [1], [1], [0], [0, 1, 1, 0], [], []>} : vector<32x16xf32>, vector<2x32xf32>, vector<16x2xf32> -> vector<16x2xf32>
    %c0_3 = arith.constant 0 : index
    %c0_4 = arith.constant 0 : index
    %3 = vector.load %arg3[%c0_3, %c0_4] : memref<16x1xf32, #tpu.memory_space<vmem>>, vector<16x1xf32>
    %4 = vector.broadcast %3 : vector<16x1xf32> to vector<16x2xf32>
    %5 = arith.addf %2, %4 : vector<16x2xf32>
    %6 = vector.extract_strided_slice %5 {offsets = [0, 0], sizes = [8, 2], strides = [1, 1]} : vector<16x2xf32> to vector<8x2xf32>
    %c0_5 = arith.constant 0 : index
    %c0_6 = arith.constant 0 : index
    %7 = vector.load %arg4[%c0_5, %c0_6] : memref<8x2xf32, #tpu.memory_space<vmem>>, vector<8x2xf32>
    tpu.vector_store %arg4[%c0_5, %c0_6], %6 {strides = array<i32>} : memref<8x2xf32, #tpu.memory_space<vmem>>, vector<8x2xf32>,
    %8 = vector.extract_strided_slice %5 {offsets = [8, 0], sizes = [8, 2], strides = [1, 1]} : vector<16x2xf32> to vector<8x2xf32>
    %cst_7 = arith.constant 0.000000e+00 : f32
    %9 = vector.broadcast %cst_7 : f32 to vector<8x2xf32>
    %10 = arith.maximumf %8, %9 : vector<8x2xf32>
    %11 = math.absf %8 : vector<8x2xf32>
    %cst_8 = arith.constant 0.000000e+00 : f32
    %12 = vector.broadcast %cst_8 : f32 to vector<8x2xf32>
    %13 = arith.subf %12, %11 : vector<8x2xf32>
    %14 = math.exp %13 : vector<8x2xf32>
    %15 = math.log1p %14 : vector<8x2xf32>
    %16 = arith.addf %10, %15 : vector<8x2xf32>
    %cst_9 = arith.constant 0.000000e+00 : f32
    %17 = vector.broadcast %cst_9 : f32 to vector<8x2xf32>
    %18 = arith.addf %16, %17 : vector<8x2xf32>
    %19 = math.sqrt %18 : vector<8x2xf32>
    %c0_10 = arith.constant 0 : index
    %c0_11 = arith.constant 0 : index
    %20 = vector.load %arg5[%c0_10, %c0_11] : memref<8x2xf32, #tpu.memory_space<vmem>>, vector<8x2xf32>
    tpu.vector_store %arg5[%c0_10, %c0_11], %19 {strides = array<i32>} : memref<8x2xf32, #tpu.memory_space<vmem>>, vector<8x2xf32>,
    return
  }
  func.func @transform_0(%arg0: i32) -> (i32, i32) {
    %c0_i32 = arith.constant 0 : i32
    %c0_i32_0 = arith.constant 0 : i32
    return %arg0, %c0_i32 : i32, i32
  }
  func.func @transform_1(%arg0: i32) -> (i32, i32) {
    %c0_i32 = arith.constant 0 : i32
    %c0_i32_0 = arith.constant 0 : i32
    %c0_i32_1 = arith.constant 0 : i32
    return %c0_i32, %c0_i32_0 : i32, i32
  }
  func.func @transform_2(%arg0: i32) -> (i32, i32) {
    %c0_i32 = arith.constant 0 : i32
    %c0_i32_0 = arith.constant 0 : i32
    %c0_i32_1 = arith.constant 0 : i32
    return %c0_i32, %c0_i32_0 : i32, i32
  }
  func.func @transform_3(%arg0: i32) -> (i32, i32) {
    %c0_i32 = arith.constant 0 : i32
    %c0_i32_0 = arith.constant 0 : i32
    return %c0_i32, %arg0 : i32, i32
  }
  func.func @transform_4(%arg0: i32) -> (i32, i32) {
    %c0_i32 = arith.constant 0 : i32
    %c0_i32_0 = arith.constant 0 : i32
    return %c0_i32, %arg0 : i32, i32
  }
}

</mosaic_0001>

<llo_original>
// kernel: diag_gaussian_head.1
$region0: #{diag_gaussian_head.1}
  #allocation0 [shape = 'u32[]', space=smem, size = 0x4, offset = 0x4, fixed_abs, tag = 'smem constant byte address 0x4 - core index']
  #allocation1 [shape = 'u32[144,128]{1,0:T(1,128)}', space=vmem, size = 0x12000, scoped, tag = 'internal scratch']
  %s0 = inlined_call_operand.vmem [shape: f32[2,32], index: 0, kind: input, shape index: {}]
  %s1 = inlined_call_operand.vmem [shape: f32[32,16], index: 1, kind: input, shape index: {}]
  %s2 = inlined_call_operand.vmem [shape: f32[16,1], index: 2, kind: input, shape index: {}]
  %s3 = inlined_call_operand.vmem [shape: f32[8,2], index: 3, kind: output, shape index: {0}]
  %s4 = inlined_call_operand.vmem [shape: f32[8,2], index: 4, kind: output, shape index: {1}]
  %5 = xla_tuple %s3, %s4
  %s6 = sld [smem:[#allocation0]]
  $region30: #{diag_gaussian_head.1} parent=0
    _
  %s8 = ssub.s32 1, %s6
  %s9 = scalar_select 0, %s8, %s6
  // Predicated region
  $region2: #{diag_gaussian_head.1} parent=0 // pred_check
    _
  $region3: #{diag_gaussian_head.1} parent=0 // pred_check_branch
    %11 = sbr.rel (0) target = $region5
  $region4: #{diag_gaussian_head.1} parent=0 // pred_region
    _
  $region5: #{diag_gaussian_head.1} parent=0 // pred_fallthru
    _
  // Predicated region
  $region6: #{diag_gaussian_head.1} parent=0 // pred_check
    _
  $region7: #{diag_gaussian_head.1} parent=0 // pred_check_branch
    %13 = sbr.rel (0) target = $region9
  $region8: #{diag_gaussian_head.1} parent=0 // pred_region
    _
  $region9: #{diag_gaussian_head.1} parent=0 // pred_fallthru
    _
  // Predicated region
  $region10: #{diag_gaussian_head.1} parent=0 // pred_check
    _
  $region11: #{diag_gaussian_head.1} parent=0 // pred_check_branch
    %15 = sbr.rel (0) target = $region13
  $region12: #{diag_gaussian_head.1} parent=0 // pred_region
    _
  $region13: #{diag_gaussian_head.1} parent=0 // pred_fallthru
    _
  %v16 = vld [vmem:[%s0] sm:$0x3]
  %v17 = vld [vmem:[%s1] sm:$0xff]
  %v18 = vld [vmem:[%s1 + $0x8] sm:$0xff]
  %v19 = vld [vmem:[%s1 + $0x10] sm:$0xff]
  %v20 = vld [vmem:[%s1 + $0x18] sm:$0xff]
  %v21 = vld [vmem:[%s2] sm:$0xff]
  %v22 = vld [vmem:[%s2 + $0x8] sm:$0xff]
  %24 = vset.pattern.permute.xlu0 0
  %25 = vperm.xlu0 %24, %v21
  %v26 = vpop.permute.xlu0 %25
  %29 = vset.pattern.permute.xlu0 0
  %30 = vperm.xlu0 %29, %v22
  %v31 = vpop.permute.xlu0 %30
  %33 = vxpose.xlu0.b32.start [1/16] %v17, 128
  %34 = vxpose.xlu0.b32.cont [2/16] %v18, 128
  %35 = vxpose.xlu0.b32.cont [3/16] %v19, 128
  %36 = vxpose.xlu0.b32.cont [4/16] %v20, 128
  %37 = vxpose.xlu0.b32.cont [5/16] 0.0, 128
  %38 = vxpose.xlu0.b32.cont [6/16] 0.0, 128
  %39 = vxpose.xlu0.b32.cont [7/16] 0.0, 128
  %40 = vxpose.xlu0.b32.cont [8/16] 0.0, 128
  %41 = vxpose.xlu0.b32.cont [9/16] 0.0, 128
  %42 = vxpose.xlu0.b32.cont [10/16] 0.0, 128
  %43 = vxpose.xlu0.b32.cont [11/16] 0.0, 128
  %44 = vxpose.xlu0.b32.cont [12/16] 0.0, 128
  %45 = vxpose.xlu0.b32.cont [13/16] 0.0, 128
  %46 = vxpose.xlu0.b32.cont [14/16] 0.0, 128
  %47 = vxpose.xlu0.b32.cont [15/16] 0.0, 128
  %48 = vxpose.xlu0.b32.end [16/16] 0.0, 128
  %v49 = vpop.trf.xlu0
  %v50 = vpop.trf.xlu0
  %v51 = vpop.trf.xlu0
  %v52 = vpop.trf.xlu0
  %v53 = vpop.trf.xlu0
  %v54 = vpop.trf.xlu0
  %v55 = vpop.trf.xlu0
  %v56 = vpop.trf.xlu0
  %v57 = vpop.trf.xlu0
  %v58 = vpop.trf.xlu0
  %v59 = vpop.trf.xlu0
  %v60 = vpop.trf.xlu0
  %v61 = vpop.trf.xlu0
  %v62 = vpop.trf.xlu0
  %v63 = vpop.trf.xlu0
  %v64 = vpop.trf.xlu0
  %vm65 = vcmask 261120
  %v67 = vsel %vm65, %v49, 0
  %v70 = vsel %vm65, %v50, 0
  %v73 = vsel %vm65, %v16, 0
  %75 = vmatprep.subr.mxu0 0.0
  %76 = vmatpush1.xpose.msra.mxu0 %v73
  %77 = vmatprep.subr.mxu0 0.0
  %78 = vmatpush1.xpose.msra.mxu0 0.0
  %79 = vmatprep.subr.mxu0 0.0
  %80 = vmatpush1.xpose.msra.mxu0 0.0
  %81 = vmatprep.subr.mxu0 0.0
  %82 = vmatpush1.xpose.msra.mxu0 0.0
  %83 = vmatprep.subr.mxu0 0.0
  %84 = vmatpush1.xpose.msra.mxu0 0.0
  %85 = vmatprep.subr.mxu0 0.0
  %86 = vmatpush1.xpose.msra.mxu0 0.0
  %87 = vmatprep.subr.mxu0 0.0
  %88 = vmatpush1.xpose.msra.mxu0 0.0
  %89 = vmatprep.subr.mxu0 0.0
  %90 = vmatpush1.xpose.msra.mxu0 0.0
  %91 = vmatprep.subr.mxu0 0.0
  %92 = vmatpush1.xpose.msra.mxu0 0.0
  %93 = vmatprep.subr.mxu0 0.0
  %94 = vmatpush1.xpose.msra.mxu0 0.0
  %95 = vmatprep.subr.mxu0 0.0
  %96 = vmatpush1.xpose.msra.mxu0 0.0
  %97 = vmatprep.subr.mxu0 0.0
  %98 = vmatpush1.xpose.msra.mxu0 0.0
  %99 = vmatprep.subr.mxu0 0.0
  %100 = vmatpush1.xpose.msra.mxu0 0.0
  %101 = vmatprep.subr.mxu0 0.0
  %102 = vmatpush1.xpose.msra.mxu0 0.0
  %103 = vmatprep.subr.mxu0 0.0
  %104 = vmatpush1.xpose.msra.mxu0 0.0
  %105 = vmatprep.subr.mxu0 0.0
  %106 = vmatpush1.xpose.msra.mxu0 0.0
  %107 = vmatprep.subr.mxu0 0.0
  %108 = vmatpush1.xpose.msra.mxu0 0.0
  %109 = vmatprep.subr.mxu0 0.0
  %110 = vmatpush1.xpose.msra.mxu0 0.0
  %111 = vmatprep.subr.mxu0 0.0
  %112 = vmatpush1.xpose.msra.mxu0 0.0
  %113 = vmatprep.subr.mxu0 0.0
  %114 = vmatpush1.xpose.msra.mxu0 0.0
  %115 = vmatprep.subr.mxu0 0.0
  %116 = vmatpush1.xpose.msra.mxu0 0.0
  %117 = vmatprep.subr.mxu0 0.0
  %118 = vmatpush1.xpose.msra.mxu0 0.0
  %119 = vmatprep.subr.mxu0 0.0
  %120 = vmatpush1.xpose.msra.mxu0 0.0
  %121 = vmatprep.subr.mxu0 0.0
  %122 = vmatpush1.xpose.msra.mxu0 0.0
  %123 = vmatprep.subr.mxu0 0.0
  %124 = vmatpush1.xpose.msra.mxu0 0.0
  %125 = vmatprep.subr.mxu0 0.0
  %126 = vmatpush1.xpose.msra.mxu0 0.0
  %127 = vmatprep.subr.mxu0 0.0
  %128 = vmatpush1.xpose.msra.mxu0 0.0
  %129 = vmatprep.subr.mxu0 0.0
  %130 = vmatpush1.xpose.msra.mxu0 0.0
  %131 = vmatprep.subr.mxu0 0.0
  %132 = vmatpush1.xpose.msra.mxu0 0.0
  %133 = vmatprep.subr.mxu0 0.0
  %134 = vmatpush1.xpose.msra.mxu0 0.0
  %135 = vmatprep.subr.mxu0 0.0
  %136 = vmatpush1.xpose.msra.mxu0 0.0
  %137 = vmatprep.subr.mxu0 0.0
  %138 = vmatpush1.xpose.msra.mxu0 0.0
  %139 = vmatprep.mubr.f32.mxu0 0.0
  %140 = vmatmul.mubr.f32.gmra.mrb[0].mxu0 %v67
  %v141 = vpop.f32.mrb[0].mxu0
  %v142 = vadd.f32 %v26, %v141
  %v143 = vpop.f32.mrb[0].mxu0
  %144 = vmatprep.mubr.f32.mxu0 0.0
  %145 = vmatmul.mubr.f32.gmra.mrb[0].mxu0 %v70
  %v146 = vpop.f32.mrb[0].mxu0
  %v147 = vadd.f32 %v31, %v146
  %v148 = vpop.f32.mrb[0].mxu0
  %149 = vdwg.mxu0
  %vm150 = vcmask 15360
  %151 = vst.msk [vmem:[%s3] sm:$0xff] %vm150, %v142
  %v152 = vmax.f32 %v147, 0.0
  %v153 = vand.u32 2147483647, %v147
  %v154 = vsub.f32 0.0, %v153
  %v155 = vmul.f32 %v154, 1.442695
  %v156 = vpow.pop %v155
  %v157 = vadd.f32 %v156, 1.0
  %v158 = vlog2.pop %v157
  %v159 = vmul.f32 %v158, 0.6931472
  %v160 = vmul.f32 -0.5, %v156
  %v161 = vadd.f32 %v160, 1.0
  %v162 = vmul.f32 %v161, %v156
  %v163 = vand.u32 2147483647, %v156
  %vm164 = vcmp.lt.f32.partialorder %v163, 0.0004427343
  %v165 = vsel %vm164, %v162, %v159
  %v166 = vadd.f32 %v152, %v165
  %v167 = vadd.f32 %v166, 0.0
  %v168 = vrsqrt.pop %v167
  %v169 = vmul.f32 %v167, %v168
  %vm170 = vcmp.eq.f32.partialorder %v167, inf
  %v171 = vsel %vm170, %v167, %v169
  %vm172 = vcmp.eq.f32.partialorder %v167, 0.0
  %v173 = vand.u32 %v167, 2147483648
  %v174 = vsel %vm172, %v173, %v171
  %175 = vst.msk [vmem:[%s4] sm:$0xff] %vm150, %v174
  // Predicated region
  $region14: #{diag_gaussian_head.1} parent=0 // pred_check
    _
  $region15: #{diag_gaussian_head.1} parent=0 // pred_check_branch
    %177 = sbr.rel (0) target = $region17
  $region16: #{diag_gaussian_head.1} parent=0 // pred_region
    _
  $region17: #{diag_gaussian_head.1} parent=0 // pred_fallthru
    _
  // Predicated region
  $region18: #{diag_gaussian_head.1} parent=0 // pred_check
    _
  $region19: #{diag_gaussian_head.1} parent=0 // pred_check_branch
    %179 = sbr.rel (0) target = $region21
  $region20: #{diag_gaussian_head.1} parent=0 // pred_region
    _
  $region21: #{diag_gaussian_head.1} parent=0 // pred_fallthru
    _
  // Predicated region
  $region22: #{diag_gaussian_head.1} parent=0 // pred_check
    _
  $region23: #{diag_gaussian_head.1} parent=0 // pred_check_branch
    %181 = sbr.rel (0) target = $region25
  $region24: #{diag_gaussian_head.1} parent=0 // pred_region
    _
  $region25: #{diag_gaussian_head.1} parent=0 // pred_fallthru
    _
  // Predicated region
  $region26: #{diag_gaussian_head.1} parent=0 // pred_check
    _
  $region27: #{diag_gaussian_head.1} parent=0 // pred_check_branch
    %183 = sbr.rel (0) target = $region29
  $region28: #{diag_gaussian_head.1} parent=0 // pred_region
    _
  $region29: #{diag_gaussian_head.1} parent=0 // pred_fallthru
    _

</llo_original>
